<compile_context>
chip_gen: v7x
topology: tpu7x:2x2x1
jax: 0.10.0
libtpu: 0.0.40
codegen_flags: <defaults>
</compile_context>

<pallas_src>
import math
import functools

import jax
import jax.numpy as jnp
from jax.experimental import pallas as pl
from jax.experimental.pallas import tpu as pltpu


# ----------------------------------------------------------------------------
# Tile selection: biggest aligned tile <= target that exactly divides the dim;
# dims <= target (or with no aligned divisor) use the full dimension.
# ----------------------------------------------------------------------------
def _pick_tile(dim, target, align):
    if dim <= target:
        return dim
    t = (target // align) * align
    while t >= align:
        if dim % t == 0:
            return t
        t -= align
    return dim  # TODO(synk): pad + masked epilogue instead of whole-axis tile.


# ----------------------------------------------------------------------------
# Tiled linear: out = x @ w_t + b, with w_t = W.T (K, N) pre-transposed on the
# host. Grid = (M//tm, N//tn, K//tk); f32 VMEM accumulator, init on k == 0,
# bias-add + store on the last k step.
# ----------------------------------------------------------------------------
def _linear_kernel(x_ref, w_ref, b_ref, o_ref, acc_ref):
    @pl.when(pl.program_id(2) == 0)
    def _():
        acc_ref[...] = jnp.zeros_like(acc_ref)

    acc_ref[...] += jnp.dot(x_ref[...], w_ref[...],
                            preferred_element_type=jnp.float32)

    @pl.when(pl.program_id(2) == pl.num_programs(2) - 1)
    def _():
        o_ref[...] = (acc_ref[...] + b_ref[...]).astype(o_ref.dtype)


def pallas_linear(x, w_t, b, *, tm=512, tn=512, tk=1024):
    """x: (M, K), w_t: (K, N) pre-transposed nn.Linear weight, b: (N,)."""
    M, K = x.shape
    N = w_t.shape[1]
    # 128-aligned (MXU-width) tiles; 512/512/1024 f32 is ~11 MiB double-buffered,
    # comfortably inside the explicit 32 MiB limit on v5e/v6e/v7x.
    tm = _pick_tile(M, tm, 8)
    tn = _pick_tile(N, tn, 128)
    tk = _pick_tile(K, tk, 128)
    b2 = b.reshape(1, N)
    cost = pl.CostEstimate(
        flops=2 * M * N * K,
        transcendentals=0,
        bytes_accessed=4 * (M * K + K * N + M * N + N))
    return pl.pallas_call(
        _linear_kernel,
        out_shape=jax.ShapeDtypeStruct((M, N), x.dtype),
        grid=(M // tm, N // tn, K // tk),
        in_specs=[
            pl.BlockSpec((tm, tk), lambda i, j, k: (i, k)),
            pl.BlockSpec((tk, tn), lambda i, j, k: (k, j)),
            pl.BlockSpec((1, tn), lambda i, j, k: (0, j)),   # bias tile per j
        ],
        out_specs=pl.BlockSpec((tm, tn), lambda i, j, k: (i, j)),
        scratch_shapes=[pltpu.VMEM((tm, tn), jnp.float32)],
        compiler_params=pltpu.CompilerParams(
            dimension_semantics=("parallel", "parallel", "arbitrary"),
            vmem_limit_bytes=32 * 1024 * 1024),
        cost_estimate=cost,
    )(x, w_t, b2)


# ----------------------------------------------------------------------------
# Flash-style scaled dot-product attention.
#   grid = (B, q_tiles, kv_tiles), kv innermost ("arbitrary").
#   Blocks stay in the natural (1, tile, d_model) layout; heads are split via
#   static lane slices in-kernel and merged back (concat) before the single
#   lane-dense output store. Online softmax state lives in VMEM scratch.
# ----------------------------------------------------------------------------
def _flash_attn_kernel(q_ref, k_ref, v_ref, o_ref, m_ref, l_ref, acc_ref,
                       *, num_heads, d_k):
    kv_step = pl.program_id(2)

    @pl.when(kv_step == 0)
    def _():
        m_ref[...] = jnp.full_like(m_ref, -jnp.inf)
        l_ref[...] = jnp.zeros_like(l_ref)
        acc_ref[...] = jnp.zeros_like(acc_ref)

    for h in range(num_heads):                       # static unroll over heads
        lo = h * d_k
        q_h = q_ref[0, :, lo:lo + d_k]               # (tq,  d_k); scale folded into W_q
        k_h = k_ref[0, :, lo:lo + d_k]               # (tkv, d_k)
        v_h = v_ref[0, :, lo:lo + d_k]               # (tkv, d_k)

        # s = q_h @ k_h.T without materializing a transpose (nt-form matmul).
        s = jax.lax.dot_general(q_h, k_h, (((1,), (1,)), ((), ())),
                                preferred_element_type=jnp.float32)   # (tq, tkv)

        m_prev = m_ref[h]                                             # (tq, 1)
        m_new = jnp.maximum(m_prev, jnp.max(s, axis=-1, keepdims=True))
        alpha = jnp.exp(m_prev - m_new)                               # (tq, 1)
        p = jnp.exp(s - m_new)                                        # (tq, tkv)

        l_ref[h] = alpha * l_ref[h] + jnp.sum(p, axis=-1, keepdims=True)
        acc_ref[h] = alpha * acc_ref[h] + jnp.dot(
            p, v_h, preferred_element_type=jnp.float32)               # (tq, d_k)
        m_ref[h] = m_new

    @pl.when(kv_step == pl.num_programs(2) - 1)
    def _():
        # Deferred softmax normalization (exact divide) + in-kernel head merge:
        # a single lane-dense (tq, H*d_k) store, no host transpose afterwards.
        parts = [acc_ref[h] * (1.0 / l_ref[h]) for h in range(num_heads)]
        o_ref[0] = jnp.concatenate(parts, axis=-1).astype(o_ref.dtype)


def pallas_attention(q, k, v, num_heads):
    """q: (B, Sq, D), k/v: (B, Skv, D), D = num_heads * d_k -> (B, Sq, D)."""
    B, Sq, D = q.shape
    Skv = k.shape[1]
    d_k = D // num_heads
    assert D == num_heads * d_k

    tq = _pick_tile(Sq, 256, 8)
    tkv = _pick_tile(Skv, 512, 8)   # >=256 keeps the PV contraction MXU-filled

    # Keep the double-buffered footprint well under v7x's 64 MiB physical VMEM.
    def _vmem_est(tq_, tkv_):
        blocks = (2 * tq_ + 2 * tkv_) * D            # q + o + k + v blocks
        scratch = tq_ * (D + 2 * num_heads)          # acc + m + l
        return 4 * (2 * blocks + scratch)

    budget = 40 * 1024 * 1024
    while _vmem_est(tq, tkv) > budget and tkv > 128:
        nxt = _pick_tile(Skv, tkv // 2, 8)
        if nxt >= tkv:
            break
        tkv = nxt

    kernel = functools.partial(_flash_attn_kernel, num_heads=num_heads, d_k=d_k)
    cost = pl.CostEstimate(
        flops=4 * B * num_heads * Sq * Skv * d_k,
        transcendentals=B * num_heads * Sq * Skv,
        bytes_accessed=4 * (2 * B * Sq * D + 2 * B * Skv * D))
    return pl.pallas_call(
        kernel,
        out_shape=jax.ShapeDtypeStruct((B, Sq, D), q.dtype),
        grid=(B, Sq // tq, Skv // tkv),
        in_specs=[
            pl.BlockSpec((1, tq, D), lambda b, qi, kv: (b, qi, 0)),
            pl.BlockSpec((1, tkv, D), lambda b, qi, kv: (b, kv, 0)),
            pl.BlockSpec((1, tkv, D), lambda b, qi, kv: (b, kv, 0)),
        ],
        out_specs=pl.BlockSpec((1, tq, D), lambda b, qi, kv: (b, qi, 0)),
        scratch_shapes=[
            pltpu.VMEM((num_heads, tq, 1), jnp.float32),     # running max
            pltpu.VMEM((num_heads, tq, 1), jnp.float32),     # running sum
            pltpu.VMEM((num_heads, tq, d_k), jnp.float32),   # output accumulator
        ],
        compiler_params=pltpu.CompilerParams(
            dimension_semantics=("parallel", "parallel", "arbitrary"),
            vmem_limit_bytes=48 * 1024 * 1024),
        cost_estimate=cost,
    )(q, k, v)


# ----------------------------------------------------------------------------
# Module wrapper (parameters + forward), mirroring MultiHeadedAttention
# ----------------------------------------------------------------------------
class MultiHeadedAttentionPallas:
    def __init__(self, h, d_model, key):
        assert d_model % h == 0
        self.d_k = d_model // h
        self.h = h
        self.d_model = d_model
        # nn.Linear default init: U(-1/sqrt(fan_in), 1/sqrt(fan_in))
        bound = 1.0 / math.sqrt(d_model)
        keys = jax.random.split(key, 8)
        self.ws, self.bs = [], []
        for i in range(4):
            w = jax.random.uniform(keys[2 * i], (d_model, d_model),
                                   jnp.float32, -bound, bound)
            b = jax.random.uniform(keys[2 * i + 1], (d_model,),
                                   jnp.float32, -bound, bound)
            self.ws.append(w)
            self.bs.append(b)

        scale = 1.0 / math.sqrt(self.d_k)
        # Pre-transposed (K, N) weights; 1/sqrt(d_k) folded into W_q / b_q once
        # on the host so the attention kernel does no per-step scaling.
        self.wq_t = self.ws[0].T * scale
        self.bq = self.bs[0] * scale
        self.wk_t = self.ws[1].T
        self.bk = self.bs[1]
        self.wv_t = self.ws[2].T
        self.bv = self.bs[2]
        self.wo_t = self.ws[3].T
        self.bo = self.bs[3]
        # Fused self-attention projection: x @ [s*Wq.T | Wk.T | Wv.T]  (K, 3N).
        self.w_qkv_t = jnp.concatenate([self.wq_t, self.wk_t, self.wv_t], axis=1)
        self.b_qkv = jnp.concatenate([self.bq, self.bk, self.bv], axis=0)

    def __call__(self, query, key, value, mask=None):
        assert mask is None  # TODO(synk): masked_fill(-1e9) branch not implemented.
        nb, sq, dm = query.shape

        if query is key and key is value:
            # Self-attention: one matmul over concatenated output features;
            # x is read from HBM once (no jnp.stack of 3x activations).
            y = pallas_linear(query.reshape(-1, dm), self.w_qkv_t, self.b_qkv)
            q2, k2, v2 = y[:, :dm], y[:, dm:2 * dm], y[:, 2 * dm:]
            skv = sq
        else:
            # Cross-attention: inputs differ, three tiled linears.
            q2 = pallas_linear(query.reshape(-1, dm), self.wq_t, self.bq)
            k2 = pallas_linear(key.reshape(-1, dm), self.wk_t, self.bk)
            v2 = pallas_linear(value.reshape(-1, dm), self.wv_t, self.bv)
            skv = key.shape[1]

        # Stay in (B, S, d_model) layout end-to-end: head split/merge is done
        # inside the attention kernel (no host-side transposes / HBM round trips).
        x = pallas_attention(q2.reshape(nb, sq, dm),
                             k2.reshape(nb, skv, dm),
                             v2.reshape(nb, skv, dm), self.h)   # (B, Sq, d_model)

        out = pallas_linear(x.reshape(-1, dm), self.wo_t, self.bo)
        return out.reshape(nb, sq, self.d_model)


# ----------------------------------------------------------------------------
# Plain-JAX reference (correctness check)
# ----------------------------------------------------------------------------
def reference_forward(mha, query, key, value):
    nb = query.shape[0]

    def lin(x, w, b):
        return x @ w.T + b

    def project(x, w, b):
        return lin(x, w, b).reshape(nb, -1, mha.h, mha.d_k).transpose(0, 2, 1, 3)

    q = project(query, mha.ws[0], mha.bs[0])
    k = project(key, mha.ws[1], mha.bs[1])
    v = project(value, mha.ws[2], mha.bs[2])
    scores = jnp.einsum("bhqd,bhkd->bhqk", q, k) / math.sqrt(mha.d_k)
    p = jax.nn.softmax(scores, axis=-1)
    x = jnp.einsum("bhqk,bhkd->bhqd", p, v)
    x = x.transpose(0, 2, 1, 3).reshape(nb, -1, mha.h * mha.d_k)
    return lin(x, mha.ws[3], mha.bs[3])


if __name__ == "__main__":
    B, S, D_MODEL, H = 2, 8, 32, 4
    root = jax.random.PRNGKey(0)
    k_param, k_q, k_k, k_v, k_param2, k_x2 = jax.random.split(root, 6)

    mha = MultiHeadedAttentionPallas(H, D_MODEL, k_param)
    query = jax.random.normal(k_q, (B, S, D_MODEL), jnp.float32)
    key = jax.random.normal(k_k, (B, S, D_MODEL), jnp.float32)
    value = jax.random.normal(k_v, (B, S, D_MODEL), jnp.float32)

    # 1) Cross-attention path (distinct q/k/v -> three separate projections).
    out = jax.block_until_ready(mha(query, key, value, mask=None))
    ref = reference_forward(mha, query, key, value)
    assert out.shape == (B, S, D_MODEL), out.shape
    assert jnp.allclose(out, ref, atol=1e-4, rtol=1e-4), \
        float(jnp.max(jnp.abs(out - ref)))

    # 2) Self-attention path (fused concat-N QKV projection, same tensor 3x).
    out_self = jax.block_until_ready(mha(query, query, query, mask=None))
    ref_self = reference_forward(mha, query, query, query)
    assert jnp.allclose(out_self, ref_self, atol=1e-4, rtol=1e-4), \
        float(jnp.max(jnp.abs(out_self - ref_self)))

    # 3) Longer sequence so the flash kernel's online softmax actually iterates
    #    over multiple q- and kv-tiles (attention grid = (1, 4, 2)).
    B2, S2, D2, H2 = 1, 1024, 64, 4
    mha2 = MultiHeadedAttentionPallas(H2, D2, k_param2)
    x2 = jax.random.normal(k_x2, (B2, S2, D2), jnp.float32)
    out2 = jax.block_until_ready(mha2(x2, x2, x2, mask=None))
    ref2 = reference_forward(mha2, x2, x2, x2)
    assert out2.shape == (B2, S2, D2), out2.shape
    assert jnp.allclose(out2, ref2, atol=1e-4, rtol=1e-4), \
        float(jnp.max(jnp.abs(out2 - ref2)))

    print("KERNEL_OK")
</pallas_src>

<mosaic_0001>
module attributes {stable_mosaic.version = 11 : i64} {
  func.func @_linear_kernel(%arg0: i32, %arg1: i32, %arg2: i32, %arg3: memref<16x32xf32, #tpu.memory_space<vmem>>, %arg4: memref<32x32xf32, #tpu.memory_space<vmem>>, %arg5: memref<1x32xf32, #tpu.memory_space<vmem>>, %arg6: memref<16x32xf32, #tpu.memory_space<vmem>>, %arg7: memref<16x32xf32, #tpu.memory_space<vmem>>) attributes {dimension_semantics = [#tpu.dimension_semantics<parallel>, #tpu.dimension_semantics<parallel>, #tpu.dimension_semantics<arbitrary>], iteration_bounds = array<i64: 1, 1, 1>, scalar_prefetch = 0 : i64, scratch_operands = 1 : i64, tpu.core_type = #tpu.core_type<tc>, window_params = [{transform_indices = @transform_0, window_bounds = array<i64: 16, 32>}, {transform_indices = @transform_1, window_bounds = array<i64: 32, 32>}, {transform_indices = @transform_2, window_bounds = array<i64: 1, 32>}, {transform_indices = @transform_3, window_bounds = array<i64: 16, 32>}]} {
    %c0_i32 = arith.constant 0 : i32
    %0 = arith.cmpi eq, %arg2, %c0_i32 : i32
    %1 = arith.extui %0 : i1 to i32
    %c0_i32_0 = arith.constant 0 : i32
    %2 = arith.cmpi ne, %1, %c0_i32_0 : i32
    scf.if %2 {
      %cst_10 = arith.constant 0.000000e+00 : f32
      %12 = vector.broadcast %cst_10 : f32 to vector<16x32xf32>
      %c0_11 = arith.constant 0 : index
      %c0_12 = arith.constant 0 : index
      %13 = vector.load %arg7[%c0_11, %c0_12] : memref<16x32xf32, #tpu.memory_space<vmem>>, vector<16x32xf32>
      tpu.vector_store %arg7[%c0_11, %c0_12], %12 {strides = array<i32>} : memref<16x32xf32, #tpu.memory_space<vmem>>, vector<16x32xf32>,
    } else {
    }
    %c0 = arith.constant 0 : index
    %c0_1 = arith.constant 0 : index
    %3 = vector.load %arg7[%c0, %c0_1] : memref<16x32xf32, #tpu.memory_space<vmem>>, vector<16x32xf32>
    %c0_2 = arith.constant 0 : index
    %c0_3 = arith.constant 0 : index
    %4 = vector.load %arg3[%c0_2, %c0_3] : memref<16x32xf32, #tpu.memory_space<vmem>>, vector<16x32xf32>
    %c0_4 = arith.constant 0 : index
    %c0_5 = arith.constant 0 : index
    %5 = vector.load %arg4[%c0_4, %c0_5] : memref<32x32xf32, #tpu.memory_space<vmem>>, vector<32x32xf32>
    %cst = arith.constant dense<0.000000e+00> : vector<16x32xf32>
    %6 = tpu.matmul %4, %5, %cst {dimension_numbers = #tpu.dot_dimension_numbers<[1], [0], [0], [1], [0, 0, 1, 1], [], []>} : vector<16x32xf32>, vector<32x32xf32>, vector<16x32xf32> -> vector<16x32xf32>
    %7 = arith.addf %3, %6 : vector<16x32xf32>
    %c0_6 = arith.constant 0 : index
    %c0_7 = arith.constant 0 : index
    %8 = vector.load %arg7[%c0_6, %c0_7] : memref<16x32xf32, #tpu.memory_space<vmem>>, vector<16x32xf32>
    tpu.vector_store %arg7[%c0_6, %c0_7], %7 {strides = array<i32>} : memref<16x32xf32, #tpu.memory_space<vmem>>, vector<16x32xf32>,
    %c0_i32_8 = arith.constant 0 : i32
    %9 = arith.cmpi eq, %arg2, %c0_i32_8 : i32
    %10 = arith.extui %9 : i1 to i32
    %c0_i32_9 = arith.constant 0 : i32
    %11 = arith.cmpi ne, %10, %c0_i32_9 : i32
    scf.if %11 {
      %c0_10 = arith.constant 0 : index
      %c0_11 = arith.constant 0 : index
      %12 = vector.load %arg7[%c0_10, %c0_11] : memref<16x32xf32, #tpu.memory_space<vmem>>, vector<16x32xf32>
      %c0_12 = arith.constant 0 : index
      %c0_13 = arith.constant 0 : index
      %13 = vector.load %arg5[%c0_12, %c0_13] : memref<1x32xf32, #tpu.memory_space<vmem>>, vector<1x32xf32>
      %14 = vector.broadcast %13 : vector<1x32xf32> to vector<16x32xf32>
      %15 = arith.addf %12, %14 : vector<16x32xf32>
      %c0_14 = arith.constant 0 : index
      %c0_15 = arith.constant 0 : index
      %16 = vector.load %arg6[%c0_14, %c0_15] : memref<16x32xf32, #tpu.memory_space<vmem>>, vector<16x32xf32>
      tpu.vector_store %arg6[%c0_14, %c0_15], %15 {strides = array<i32>} : memref<16x32xf32, #tpu.memory_space<vmem>>, vector<16x32xf32>,
    } else {
    }
    return
  }
  func.func @transform_0(%arg0: i32, %arg1: i32, %arg2: i32) -> (i32, i32) {
    %c0_i32 = arith.constant 0 : i32
    return %arg0, %arg2 : i32, i32
  }
  func.func @transform_1(%arg0: i32, %arg1: i32, %arg2: i32) -> (i32, i32) {
    %c0_i32 = arith.constant 0 : i32
    return %arg2, %arg1 : i32, i32
  }
  func.func @transform_2(%arg0: i32, %arg1: i32, %arg2: i32) -> (i32, i32) {
    %c0_i32 = arith.constant 0 : i32
    %c0_i32_0 = arith.constant 0 : i32
    return %c0_i32, %arg1 : i32, i32
  }
  func.func @transform_3(%arg0: i32, %arg1: i32, %arg2: i32) -> (i32, i32) {
    %c0_i32 = arith.constant 0 : i32
    return %arg0, %arg1 : i32, i32
  }
}

</mosaic_0001>

<llo_original>
// kernel: tpu_custom_call.1
$region0: #{tpu_custom_call.1}
  #allocation0 [shape = 'u32[]', space=smem, size = 0x4, offset = 0x4, fixed_abs, tag = 'smem constant byte address 0x4 - core index']
  #allocation1 [shape = 'u32[144,128]{1,0:T(1,128)}', space=vmem, size = 0x12000, scoped, tag = 'internal scratch']
  #allocation2 [shape = 'f32[16,32]{1,0:T(8,128)}', space=vmem, size = 0x2000, scoped, tag = 'scratch operand']
  %s0 = inlined_call_operand.hbm [shape: f32[16,32], index: 0, kind: input, shape index: {}]
  %s1 = inlined_call_operand.hbm [shape: f32[32,32], index: 1, kind: input, shape index: {}]
  %s2 = inlined_call_operand.vmem [shape: f32[1,32], index: 2, kind: input, shape index: {}]
  %s3 = inlined_call_operand.hbm [shape: f32[16,32], index: 3, kind: output, shape index: {}]
  %s4 = sld [smem:[#allocation0]]
  $region38: #{tpu_custom_call.1} parent=0
    _
  %s6 = ssub.s32 1, %s4
  %s7 = scalar_select 0, %s6, %s4
  $region1: #{tpu_custom_call.1} parent=0
    #allocation3 [shape = 'u8[8192]{0}', space=vmem, size = 0x2000, scoped, tag = 'input window, operand 0, single buffered']
    #allocation4 [shape = 's32[1]{0}', space=sflag, size = 0x4, scoped, tag = 'scoped memory for tpu_custom_call.1']
    #allocation5 [shape = 's32[1]{0}', space=sflag, size = 0x4, scoped, tag = 'scoped memory for tpu_custom_call.1']
    #allocation6 [shape = 'u8[16384]{0}', space=vmem, size = 0x4000, scoped, tag = 'input window, operand 1, single buffered']
    #allocation7 [shape = 's32[1]{0}', space=sflag, size = 0x4, scoped, tag = 'scoped memory for tpu_custom_call.1']
    #allocation8 [shape = 'u8[8192]{0}', space=vmem, size = 0x2000, scoped, tag = 'output window, operand 0, single buffered']
    %8 = vsyncpa [#allocation4], 0
    %9 = vsyncpa [#allocation7], 0
    %10 = vsyncpa [#allocation5], 0
    // Predicated region
    $region2: #{tpu_custom_call.1} parent=1 // pred_check
      _
    $region3: #{tpu_custom_call.1} parent=1 // pred_check_branch
      %12 = sbr.rel (0) target = $region5
    $region4: #{tpu_custom_call.1} parent=1 // pred_region
      %s14 = ssub.s32 256, 256
      %15 = vsyncadd [#allocation4], %s14
      %s16 = sshll.u32 [#allocation3], 4
      %s17 = int_to_ptr.vmem [resolvable:$true] %s16
      %22 = dma.hbm_to_vmem [thread:$0]  %s0, 256, %s17, [#allocation4], 128, 128, 8
    $region5: #{tpu_custom_call.1} parent=1 // pred_fallthru
      _
    // Predicated region
    $region6: #{tpu_custom_call.1} parent=1 // pred_check
      _
    $region7: #{tpu_custom_call.1} parent=1 // pred_check_branch
      %24 = sbr.rel (0) target = $region9
    $region8: #{tpu_custom_call.1} parent=1 // pred_region
      %s26 = ssub.s32 512, 512
      %27 = vsyncadd [#allocation7], %s26
      %s28 = sshll.u32 [#allocation6], 4
      %s29 = int_to_ptr.vmem [resolvable:$true] %s28
      %34 = dma.hbm_to_vmem [thread:$0]  %s1, 512, %s29, [#allocation7], 128, 128, 8
    $region9: #{tpu_custom_call.1} parent=1 // pred_fallthru
      _
    // Predicated region
    $region10: #{tpu_custom_call.1} parent=1 // pred_check
      _
    $region11: #{tpu_custom_call.1} parent=1 // pred_check_branch
      %36 = sbr.rel (0) target = $region13
    $region12: #{tpu_custom_call.1} parent=1 // pred_region
      _
    $region13: #{tpu_custom_call.1} parent=1 // pred_fallthru
      _
    // Predicated region
    $region14: #{tpu_custom_call.1} parent=1 // pred_check
      _
    $region15: #{tpu_custom_call.1} parent=1 // pred_check_branch
      %38 = sbr.rel (0) target = $region17
    $region16: #{tpu_custom_call.1} parent=1 // pred_region
      %39 = dma.done [#allocation4], 256
    $region17: #{tpu_custom_call.1} parent=1 // pred_fallthru
      _
    // Predicated region
    $region18: #{tpu_custom_call.1} parent=1 // pred_check
      _
    $region19: #{tpu_custom_call.1} parent=1 // pred_check_branch
      %41 = sbr.rel (0) target = $region21
    $region20: #{tpu_custom_call.1} parent=1 // pred_region
      %42 = dma.done [#allocation7], 512
    $region21: #{tpu_custom_call.1} parent=1 // pred_fallthru
      _
    %p43 = scmp.eq.s32.totalorder 0, 0
    // Predicated region
    $region22: #{tpu_custom_call.1} parent=1 // pred_check
      %p44 = pneg %p43
    $region23: #{tpu_custom_call.1} parent=1 // pred_check_branch
      %46 = sbr.rel (%p44) target = $region25
    $region24: #{tpu_custom_call.1} parent=1 // pred_region
      %vm47 = vcmask 261120
      %48 = vst.msk [vmem:[#allocation2] sm:$0xff] %vm47, 0.0
      %49 = vst.msk [vmem:[#allocation2 + $0x8] sm:$0xff] %vm47, 0.0
    $region25: #{tpu_custom_call.1} parent=1 // pred_fallthru
      _
    %v50 = vld [vmem:[#allocation2] sm:$0xff]
    %v51 = vld [vmem:[#allocation2 + $0x8] sm:$0xff]
    %v52 = vld [vmem:[#allocation3] sm:$0xff]
    %v53 = vld [vmem:[#allocation3 + $0x8] sm:$0xff]
    %v54 = vld [vmem:[#allocation6] sm:$0xff]
    %v55 = vld [vmem:[#allocation6 + $0x8] sm:$0xff]
    %v56 = vld [vmem:[#allocation6 + $0x10] sm:$0xff]
    %v57 = vld [vmem:[#allocation6 + $0x18] sm:$0xff]
    %vm58 = vcmask 261120
    %v60 = vsel %vm58, %v52, 0
    %v63 = vsel %vm58, %v53, 0
    %65 = vmatprep.subr.mxu0 0.0
    %66 = vmatpush1.msra.mxu0 %v54
    %67 = vmatprep.subr.mxu0 0.0
    %68 = vmatpush1.msra.mxu0 %v55
    %69 = vmatprep.subr.mxu0 0.0
    %70 = vmatpush1.msra.mxu0 %v56
    %71 = vmatprep.subr.mxu0 0.0
    %72 = vmatpush1.msra.mxu0 %v57
    %73 = vmatprep.subr.mxu0 0.0
    %74 = vmatpush1.msra.mxu0 0.0
    %75 = vmatprep.subr.mxu0 0.0
    %76 = vmatpush1.msra.mxu0 0.0
    %77 = vmatprep.subr.mxu0 0.0
    %78 = vmatpush1.msra.mxu0 0.0
    %79 = vmatprep.subr.mxu0 0.0
    %80 = vmatpush1.msra.mxu0 0.0
    %81 = vmatprep.subr.mxu0 0.0
    %82 = vmatpush1.msra.mxu0 0.0
    %83 = vmatprep.subr.mxu0 0.0
    %84 = vmatpush1.msra.mxu0 0.0
    %85 = vmatprep.subr.mxu0 0.0
    %86 = vmatpush1.msra.mxu0 0.0
    %87 = vmatprep.subr.mxu0 0.0
    %88 = vmatpush1.msra.mxu0 0.0
    %89 = vmatprep.subr.mxu0 0.0
    %90 = vmatpush1.msra.mxu0 0.0
    %91 = vmatprep.subr.mxu0 0.0
    %92 = vmatpush1.msra.mxu0 0.0
    %93 = vmatprep.subr.mxu0 0.0
    %94 = vmatpush1.msra.mxu0 0.0
    %95 = vmatprep.subr.mxu0 0.0
    %96 = vmatpush1.msra.mxu0 0.0
    %97 = vmatprep.subr.mxu0 0.0
    %98 = vmatpush1.msra.mxu0 0.0
    %99 = vmatprep.subr.mxu0 0.0
    %100 = vmatpush1.msra.mxu0 0.0
    %101 = vmatprep.subr.mxu0 0.0
    %102 = vmatpush1.msra.mxu0 0.0
    %103 = vmatprep.subr.mxu0 0.0
    %104 = vmatpush1.msra.mxu0 0.0
    %105 = vmatprep.subr.mxu0 0.0
    %106 = vmatpush1.msra.mxu0 0.0
    %107 = vmatprep.subr.mxu0 0.0
    %108 = vmatpush1.msra.mxu0 0.0
    %109 = vmatprep.subr.mxu0 0.0
    %110 = vmatpush1.msra.mxu0 0.0
    %111 = vmatprep.subr.mxu0 0.0
    %112 = vmatpush1.msra.mxu0 0.0
    %113 = vmatprep.subr.mxu0 0.0
    %114 = vmatpush1.msra.mxu0 0.0
    %115 = vmatprep.subr.mxu0 0.0
    %116 = vmatpush1.msra.mxu0 0.0
    %117 = vmatprep.subr.mxu0 0.0
    %118 = vmatpush1.msra.mxu0 0.0
    %119 = vmatprep.subr.mxu0 0.0
    %120 = vmatpush1.msra.mxu0 0.0
    %121 = vmatprep.subr.mxu0 0.0
    %122 = vmatpush1.msra.mxu0 0.0
    %123 = vmatprep.subr.mxu0 0.0
    %124 = vmatpush1.msra.mxu0 0.0
    %125 = vmatprep.subr.mxu0 0.0
    %126 = vmatpush1.msra.mxu0 0.0
    %127 = vmatprep.subr.mxu0 0.0
    %128 = vmatpush1.msra.mxu0 0.0
    %129 = vmatprep.mubr.f32.mxu0 0.0
    %130 = vmatmul.mubr.f32.gmra.mrb[0].mxu0 %v60
    %v131 = vpop.f32.mrb[0].mxu0
    %v132 = vadd.f32 0.0, %v131
    %v133 = vpop.f32.mrb[0].mxu0
    %134 = vmatprep.mubr.f32.mxu0 0.0
    %135 = vmatmul.mubr.f32.gmra.mrb[0].mxu0 %v63
    %v136 = vpop.f32.mrb[0].mxu0
    %v137 = vadd.f32 0.0, %v136
    %v138 = vpop.f32.mrb[0].mxu0
    %139 = vdwg.mxu0
    %v140 = vadd.f32 %v50, %v132
    %v141 = vadd.f32 %v51, %v137
    %142 = vst.msk [vmem:[#allocation2] sm:$0xff] %vm58, %v140
    %143 = vst.msk [vmem:[#allocation2 + $0x8] sm:$0xff] %vm58, %v141
    // Predicated region
    $region26: #{tpu_custom_call.1} parent=1 // pred_check
      %p144 = pneg %p43
    $region27: #{tpu_custom_call.1} parent=1 // pred_check_branch
      %146 = sbr.rel (%p144) target = $region29
    $region28: #{tpu_custom_call.1} parent=1 // pred_region
      %v147 = vld [vmem:[#allocation2] sm:$0xff]
      %v148 = vld [vmem:[#allocation2 + $0x8] sm:$0xff]
      %v149 = vld [vmem:[%s2] sm:$0x1]
      %v151 = vlaneseq
      %v152 = vshrl.u32 %v151, 7
      %v153 = vsub.s32 0, %v152
      %v154 = vrot.slane %v149, %v153
      %v156 = vadd.f32 %v147, %v154
      %v157 = vadd.f32 %v148, %v154
      %158 = vst.msk [vmem:[#allocation8] sm:$0xff] %vm58, %v156
      %159 = vst.msk [vmem:[#allocation8 + $0x8] sm:$0xff] %vm58, %v157
    $region29: #{tpu_custom_call.1} parent=1 // pred_fallthru
      _
    // Predicated region
    $region30: #{tpu_custom_call.1} parent=1 // pred_check
      _
    $region31: #{tpu_custom_call.1} parent=1 // pred_check_branch
      %161 = sbr.rel (0) target = $region33
    $region32: #{tpu_custom_call.1} parent=1 // pred_region
      %s163 = ssub.s32 256, 256
      %164 = vsyncadd [#allocation5], %s163
      %s165 = sshll.u32 [#allocation8], 4
      %s166 = int_to_ptr.vmem [resolvable:$true] %s165
      %171 = dma.vmem_to_hbm [thread:$0]  %s166, 256, %s3, [#allocation5], 128, 128, 8
    $region33: #{tpu_custom_call.1} parent=1 // pred_fallthru
      _
    // Predicated region
    $region34: #{tpu_custom_call.1} parent=1 // pred_check
      _
    $region35: #{tpu_custom_call.1} parent=1 // pred_check_branch
      %173 = sbr.rel (0) target = $region37
    $region36: #{tpu_custom_call.1} parent=1 // pred_region
      %174 = dma.done [#allocation5], 256
    $region37: #{tpu_custom_call.1} parent=1 // pred_fallthru
      _
    %175 = vsyncpa [#allocation4], 1
    %176 = vsyncpa [#allocation7], 1
    %177 = vsyncpa [#allocation5], 1

</llo_original>
